<compile_context>
chip_gen: v5e
topology: v5e:2x2
jax: 0.10.0
libtpu: 0.0.40
codegen_flags: <defaults>
</compile_context>

<pallas_src>
import math

import jax
import jax.numpy as jnp
from jax import lax
from jax.experimental import pallas as pl
from jax.experimental.pallas import tpu as pltpu


_LANES = 128


def _round_up(x, mult):
    return ((x + mult - 1) // mult) * mult


def _num_tensorcores():
    """Best-effort TensorCores-per-device (v4/v5p/v7x: 2; v5e/v6e: 1)."""
    try:
        kind = jax.devices()[0].device_kind.lower()
    except Exception:
        return 1
    if any(tag in kind for tag in ("v4", "v5p", "v7")):
        return 2
    return 1


def _make_lif_kernel(a, b, v0, tc, unroll, t_valid=None):
    a = float(a)
    b = float(b)
    v0 = float(v0)

    def hard(v):
        # H(v - v0) with torch.sign's exact tie behaviour (v == v0 -> 0.5),
        # as a direct 3-way select (cheaper than sign + add + mul + cast).
        return jnp.where(v > v0, 1.0, jnp.where(v < v0, 0.0, 0.5))

    def lif_kernel(xi_ref, s_ref, v_ref):
        # grid = (feature_tiles, time_blocks); time is the inner, sequential axis.
        t_blk = pl.program_id(1)
        first = t_blk == 0

        # v is resident in the output block across the time axis; select zero
        # at the first time block instead of a store+reload (the unselected
        # garbage read is discarded by the select, never touched arithmetically).
        v = jnp.where(first, 0.0, v_ref[...])
        # Reset gate of the previous step, recomputed ONCE per grid step from
        # the stored v (bit-identical to the spike that produced it; at the
        # global first step v == 0, so the gate multiplies zero regardless).
        s = hard(v)

        def step(i, carry):
            v, s = carry
            xi = xi_ref[i].astype(jnp.float32)
            # (1 - s) * a * v  ==  (a - a*s) * v  bit-exactly for s in {0,0.5,1}.
            v_new = (a - a * s) * v + b * xi
            s_new = hard(v_new)
            s_ref[i] = s_new.astype(s_ref.dtype)
            if t_valid is not None:
                # Trailing zero-padded timesteps must not perturb the carried
                # state (their spike outputs are dropped by the wrapper).
                live = t_blk * tc + i < t_valid
                v_new = jnp.where(live, v_new, v)
                s_new = jnp.where(live, s_new, s)
            return v_new, s_new

        v, _ = lax.fori_loop(0, tc, step, (v, s), unroll=unroll)
        v_ref[...] = v

    return lif_kernel


def lif_forward(xi_seq, *, tau=8.0, v0=1.0, beta=5.0, decay=None,
                spike_dtype=jnp.bfloat16, tc_max=32, tm_cap=64):
    """Run the LIF layer over a sequence.

    xi_seq: (T, B, *feature_dims), float32 or bfloat16 (other dtypes upcast to f32).
    Returns (spikes (T, B, *feature_dims) in `spike_dtype`,
             final membrane potential (B, *feature_dims) float32).

    Spike values are exactly {0, 0.5, 1}, so bfloat16 output is lossless; pass
    spike_dtype=jnp.float32 to mirror the PyTorch output dtype exactly.
    `beta` only shapes the surrogate gradient (HardSoft.backward); the forward
    pass is the hard threshold H, which is what this kernel implements.
    """
    if decay is None:
        a = math.exp(-1.0 / tau)
        b = tau * (1.0 - a)
    else:
        a = float(decay)
        b = 1.0

    xi_seq = jnp.asarray(xi_seq)
    if xi_seq.dtype not in (jnp.dtype(jnp.float32), jnp.dtype(jnp.bfloat16)):
        xi_seq = xi_seq.astype(jnp.float32)
    in_bytes = xi_seq.dtype.itemsize
    spike_bytes = jnp.dtype(spike_dtype).itemsize

    T = xi_seq.shape[0]
    frame_shape = xi_seq.shape[1:]
    n = 1
    for d in frame_shape:
        n *= int(d)

    # ---- time blocking: nb blocks of tc fused timesteps, minimal tail pad ----
    nb = -(-T // tc_max)
    tc = -(-T // nb)
    t_pad = nb * tc

    # ---- feature blocking: rows of 128 lanes, tm <= tm_cap, dtype-aligned ----
    sub_mult = 16 if spike_bytes == 2 else (32 if spike_bytes == 1 else 8)
    m = _round_up(-(-n // _LANES), sub_mult)
    cap = max(int(tm_cap), sub_mult)
    ntiles = -(-m // cap)
    if _num_tensorcores() >= 2 and m >= 2 * sub_mult:
        # Feed both TensorCores with an even number of feature tiles.
        ntiles = max(ntiles, 2)
        ntiles += ntiles % 2
    tm = _round_up(-(-m // ntiles), sub_mult)
    m_pad = ntiles * tm

    # ---- layout: flatten each frame and pad to (t_pad, m_pad, 128) ----
    flat = xi_seq.reshape(T, n)
    feat_pad = m_pad * _LANES - n
    time_pad = t_pad - T
    if feat_pad or time_pad:
        # TODO(synk): mask the ragged last feature tile in-kernel instead of a
        # wrapper-side pad to avoid an extra HBM pass for awkward feature counts.
        flat = jnp.pad(flat, ((0, time_pad), (0, feat_pad)))
    x = flat.reshape(t_pad, m_pad, _LANES)

    grid = (m_pad // tm, t_pad // tc)
    unroll = tc if tc <= 8 else 8
    kernel = _make_lif_kernel(a, b, v0, tc, unroll,
                              t_valid=T if time_pad else None)

    block_elems = tc * tm * _LANES
    needed = 2 * block_elems * (in_bytes + spike_bytes) + 2 * tm * _LANES * 4
    vmem_limit = int(min(max(needed + (4 << 20), 16 << 20), 32 << 20))

    spikes, v_final = pl.pallas_call(
        kernel,
        out_shape=(
            jax.ShapeDtypeStruct((t_pad, m_pad, _LANES), spike_dtype),
            jax.ShapeDtypeStruct((m_pad, _LANES), jnp.float32),
        ),
        grid_spec=pltpu.PrefetchScalarGridSpec(
            num_scalar_prefetch=0,
            grid=grid,
            in_specs=[pl.BlockSpec((tc, tm, _LANES), lambda f, t: (t, f, 0))],
            out_specs=(
                pl.BlockSpec((tc, tm, _LANES), lambda f, t: (t, f, 0)),
                pl.BlockSpec((tm, _LANES), lambda f, t: (f, 0)),
            ),
        ),
        compiler_params=pltpu.CompilerParams(
            dimension_semantics=("parallel", "arbitrary"),
            vmem_limit_bytes=vmem_limit,
        ),
    )(x)

    spikes = spikes.reshape(t_pad, m_pad * _LANES)
    v_flat = v_final.reshape(m_pad * _LANES)
    if feat_pad or time_pad:
        spikes = spikes[:T, :n]
        v_flat = v_flat[:n]
    spikes = spikes.reshape((T,) + frame_shape)
    v_final = v_flat.reshape(frame_shape)
    return spikes, v_final


def lif_reference(xi_seq, *, tau=8.0, v0=1.0, decay=None):
    """Pure-JAX reference mirroring the PyTorch module (forward pass)."""
    if decay is None:
        a = math.exp(-1.0 / tau)
        b = tau * (1.0 - a)
    else:
        a = float(decay)
        b = 1.0
    T = xi_seq.shape[0]
    v = jnp.zeros_like(xi_seq[0])
    s = jnp.zeros_like(xi_seq[0])
    outs = []
    for t in range(T):
        v = (1.0 - s) * a * v + b * xi_seq[t]
        s = 0.5 * (jnp.sign(v - v0) + 1.0)
        outs.append(s)
    return jnp.stack(outs, axis=0), v


if __name__ == "__main__":
    # T=8 timesteps, batch=2, channels=4, spatial 16x16 -> 2048 features/frame.
    T, B, C, H, W = 8, 2, 4, 16, 16
    key = jax.random.PRNGKey(0)
    x_nchw = jax.random.normal(key, (T, B, C, H, W), dtype=jnp.float32) * 0.3

    spikes, v_final = lif_forward(x_nchw, tau=8.0, v0=1.0, beta=5.0)
    spikes = jax.block_until_ready(spikes)
    v_final = jax.block_until_ready(v_final)

    # Pure-JAX reference on the flattened (T, B, F) view.
    F = C * H * W
    xi_flat = x_nchw.reshape(T, B, F)
    spikes_ref, v_ref = lif_reference(xi_flat, tau=8.0, v0=1.0)

    s_k = spikes.reshape(T, B, F).astype(jnp.float32)   # bf16 spikes are exact 0/0.5/1
    v_k = v_final.reshape(B, F)

    assert s_k.shape == spikes_ref.shape
    assert jnp.allclose(s_k, spikes_ref, atol=1e-5, rtol=1e-5)
    assert jnp.allclose(v_k, v_ref, atol=1e-4, rtol=1e-4)

    print("KERNEL_OK")
</pallas_src>

<mosaic_0001>
module attributes {stable_mosaic.version = 11 : i64} {
  func.func @lif_kernel(%arg0: i32, %arg1: i32, %arg2: memref<8x16x128xf32, #tpu.memory_space<vmem>>, %arg3: memref<8x16x128xbf16, #tpu.memory_space<vmem>>, %arg4: memref<16x128xf32, #tpu.memory_space<vmem>>) attributes {dimension_semantics = [#tpu.dimension_semantics<parallel>, #tpu.dimension_semantics<arbitrary>], iteration_bounds = array<i64: 1, 1>, scalar_prefetch = 0 : i64, scratch_operands = 0 : i64, tpu.core_type = #tpu.core_type<tc>, window_params = [{transform_indices = @transform_0, window_bounds = array<i64: 8, 16, 128>}, {transform_indices = @transform_1, window_bounds = array<i64: 8, 16, 128>}, {transform_indices = @transform_2, window_bounds = array<i64: 16, 128>}]} {
    %c0_i32 = arith.constant 0 : i32
    %0 = arith.cmpi eq, %arg1, %c0_i32 : i32
    %c0 = arith.constant 0 : index
    %c0_0 = arith.constant 0 : index
    %1 = vector.load %arg4[%c0, %c0_0] : memref<16x128xf32, #tpu.memory_space<vmem>>, vector<16x128xf32>
    %cst = arith.constant 0.000000e+00 : f32
    %2 = vector.broadcast %cst : f32 to vector<16x128xf32>
    %3 = arith.select %0, %2, %1 : vector<16x128xf32>
    %cst_1 = arith.constant 1.000000e+00 : f32
    %4 = vector.broadcast %cst_1 : f32 to vector<16x128xf32>
    %5 = arith.cmpf ogt, %3, %4 : vector<16x128xf32>
    %cst_2 = arith.constant 1.000000e+00 : f32
    %6 = vector.broadcast %cst_2 : f32 to vector<16x128xf32>
    %7 = arith.cmpf olt, %3, %6 : vector<16x128xf32>
    %cst_3 = arith.constant 0.000000e+00 : f32
    %cst_4 = arith.constant 5.000000e-01 : f32
    %8 = vector.broadcast %cst_3 : f32 to vector<16x128xf32>
    %9 = vector.broadcast %cst_4 : f32 to vector<16x128xf32>
    %10 = arith.select %7, %8, %9 : vector<16x128xi1>, vector<16x128xf32>
    %cst_5 = arith.constant 1.000000e+00 : f32
    %11 = vector.broadcast %cst_5 : f32 to vector<16x128xf32>
    %12 = arith.select %5, %11, %10 : vector<16x128xi1>, vector<16x128xf32>
    %c0_i32_6 = arith.constant 0 : i32
    %13 = arith.index_cast %c0_i32_6 : i32 to index
    %c0_7 = arith.constant 0 : index
    %c0_8 = arith.constant 0 : index
    %14 = vector.load %arg2[%13, %c0_7, %c0_8] : memref<8x16x128xf32, #tpu.memory_space<vmem>>, vector<1x16x128xf32>
    %15 = vector.shape_cast %14 : vector<1x16x128xf32> to vector<16x128xf32>
    %cst_9 = arith.constant 0.882496893 : f32
    %16 = vector.broadcast %cst_9 : f32 to vector<16x128xf32>
    %17 = arith.mulf %16, %12 : vector<16x128xf32>
    %cst_10 = arith.constant 0.882496893 : f32
    %18 = vector.broadcast %cst_10 : f32 to vector<16x128xf32>
    %19 = arith.subf %18, %17 : vector<16x128xf32>
    %20 = arith.mulf %19, %3 : vector<16x128xf32>
    %cst_11 = arith.constant 0.940024793 : f32
    %21 = vector.broadcast %cst_11 : f32 to vector<16x128xf32>
    %22 = arith.mulf %21, %15 : vector<16x128xf32>
    %23 = arith.addf %20, %22 : vector<16x128xf32>
    %cst_12 = arith.constant 1.000000e+00 : f32
    %24 = vector.broadcast %cst_12 : f32 to vector<16x128xf32>
    %25 = arith.cmpf ogt, %23, %24 : vector<16x128xf32>
    %cst_13 = arith.constant 1.000000e+00 : f32
    %26 = vector.broadcast %cst_13 : f32 to vector<16x128xf32>
    %27 = arith.cmpf olt, %23, %26 : vector<16x128xf32>
    %cst_14 = arith.constant 0.000000e+00 : f32
    %cst_15 = arith.constant 5.000000e-01 : f32
    %28 = vector.broadcast %cst_14 : f32 to vector<16x128xf32>
    %29 = vector.broadcast %cst_15 : f32 to vector<16x128xf32>
    %30 = arith.select %27, %28, %29 : vector<16x128xi1>, vector<16x128xf32>
    %cst_16 = arith.constant 1.000000e+00 : f32
    %31 = vector.broadcast %cst_16 : f32 to vector<16x128xf32>
    %32 = arith.select %25, %31, %30 : vector<16x128xi1>, vector<16x128xf32>
    %33 = arith.truncf %32 : vector<16x128xf32> to vector<16x128xbf16>
    %34 = arith.index_cast %c0_i32_6 : i32 to index
    %c0_17 = arith.constant 0 : index
    %c0_18 = arith.constant 0 : index
    %35 = vector.load %arg3[%34, %c0_17, %c0_18] : memref<8x16x128xbf16, #tpu.memory_space<vmem>>, vector<1x16x128xbf16>
    %36 = vector.shape_cast %35 : vector<1x16x128xbf16> to vector<16x128xbf16>
    %37 = vector.shape_cast %33 : vector<16x128xbf16> to vector<1x16x128xbf16>
    tpu.vector_store %arg3[%34, %c0_17, %c0_18], %37 {strides = array<i32>} : memref<8x16x128xbf16, #tpu.memory_space<vmem>>, vector<1x16x128xbf16>,
    %c1_i32 = arith.constant 1 : i32
    %38 = arith.index_cast %c1_i32 : i32 to index
    %c0_19 = arith.constant 0 : index
    %c0_20 = arith.constant 0 : index
    %39 = vector.load %arg2[%38, %c0_19, %c0_20] : memref<8x16x128xf32, #tpu.memory_space<vmem>>, vector<1x16x128xf32>
    %40 = vector.shape_cast %39 : vector<1x16x128xf32> to vector<16x128xf32>
    %cst_21 = arith.constant 0.882496893 : f32
    %41 = vector.broadcast %cst_21 : f32 to vector<16x128xf32>
    %42 = arith.mulf %41, %32 : vector<16x128xf32>
    %cst_22 = arith.constant 0.882496893 : f32
    %43 = vector.broadcast %cst_22 : f32 to vector<16x128xf32>
    %44 = arith.subf %43, %42 : vector<16x128xf32>
    %45 = arith.mulf %44, %23 : vector<16x128xf32>
    %cst_23 = arith.constant 0.940024793 : f32
    %46 = vector.broadcast %cst_23 : f32 to vector<16x128xf32>
    %47 = arith.mulf %46, %40 : vector<16x128xf32>
    %48 = arith.addf %45, %47 : vector<16x128xf32>
    %cst_24 = arith.constant 1.000000e+00 : f32
    %49 = vector.broadcast %cst_24 : f32 to vector<16x128xf32>
    %50 = arith.cmpf ogt, %48, %49 : vector<16x128xf32>
    %cst_25 = arith.constant 1.000000e+00 : f32
    %51 = vector.broadcast %cst_25 : f32 to vector<16x128xf32>
    %52 = arith.cmpf olt, %48, %51 : vector<16x128xf32>
    %cst_26 = arith.constant 0.000000e+00 : f32
    %cst_27 = arith.constant 5.000000e-01 : f32
    %53 = vector.broadcast %cst_26 : f32 to vector<16x128xf32>
    %54 = vector.broadcast %cst_27 : f32 to vector<16x128xf32>
    %55 = arith.select %52, %53, %54 : vector<16x128xi1>, vector<16x128xf32>
    %cst_28 = arith.constant 1.000000e+00 : f32
    %56 = vector.broadcast %cst_28 : f32 to vector<16x128xf32>
    %57 = arith.select %50, %56, %55 : vector<16x128xi1>, vector<16x128xf32>
    %58 = arith.truncf %57 : vector<16x128xf32> to vector<16x128xbf16>
    %59 = arith.index_cast %c1_i32 : i32 to index
    %c0_29 = arith.constant 0 : index
    %c0_30 = arith.constant 0 : index
    %60 = vector.load %arg3[%59, %c0_29, %c0_30] : memref<8x16x128xbf16, #tpu.memory_space<vmem>>, vector<1x16x128xbf16>
    %61 = vector.shape_cast %60 : vector<1x16x128xbf16> to vector<16x128xbf16>
    %62 = vector.shape_cast %58 : vector<16x128xbf16> to vector<1x16x128xbf16>
    tpu.vector_store %arg3[%59, %c0_29, %c0_30], %62 {strides = array<i32>} : memref<8x16x128xbf16, #tpu.memory_space<vmem>>, vector<1x16x128xbf16>,
    %c2_i32 = arith.constant 2 : i32
    %63 = arith.index_cast %c2_i32 : i32 to index
    %c0_31 = arith.constant 0 : index
    %c0_32 = arith.constant 0 : index
    %64 = vector.load %arg2[%63, %c0_31, %c0_32] : memref<8x16x128xf32, #tpu.memory_space<vmem>>, vector<1x16x128xf32>
    %65 = vector.shape_cast %64 : vector<1x16x128xf32> to vector<16x128xf32>
    %cst_33 = arith.constant 0.882496893 : f32
    %66 = vector.broadcast %cst_33 : f32 to vector<16x128xf32>
    %67 = arith.mulf %66, %57 : vector<16x128xf32>
    %cst_34 = arith.constant 0.882496893 : f32
    %68 = vector.broadcast %cst_34 : f32 to vector<16x128xf32>
    %69 = arith.subf %68, %67 : vector<16x128xf32>
    %70 = arith.mulf %69, %48 : vector<16x128xf32>
    %cst_35 = arith.constant 0.940024793 : f32
    %71 = vector.broadcast %cst_35 : f32 to vector<16x128xf32>
    %72 = arith.mulf %71, %65 : vector<16x128xf32>
    %73 = arith.addf %70, %72 : vector<16x128xf32>
    %cst_36 = arith.constant 1.000000e+00 : f32
    %74 = vector.broadcast %cst_36 : f32 to vector<16x128xf32>
    %75 = arith.cmpf ogt, %73, %74 : vector<16x128xf32>
    %cst_37 = arith.constant 1.000000e+00 : f32
    %76 = vector.broadcast %cst_37 : f32 to vector<16x128xf32>
    %77 = arith.cmpf olt, %73, %76 : vector<16x128xf32>
    %cst_38 = arith.constant 0.000000e+00 : f32
    %cst_39 = arith.constant 5.000000e-01 : f32
    %78 = vector.broadcast %cst_38 : f32 to vector<16x128xf32>
    %79 = vector.broadcast %cst_39 : f32 to vector<16x128xf32>
    %80 = arith.select %77, %78, %79 : vector<16x128xi1>, vector<16x128xf32>
    %cst_40 = arith.constant 1.000000e+00 : f32
    %81 = vector.broadcast %cst_40 : f32 to vector<16x128xf32>
    %82 = arith.select %75, %81, %80 : vector<16x128xi1>, vector<16x128xf32>
    %83 = arith.truncf %82 : vector<16x128xf32> to vector<16x128xbf16>
    %84 = arith.index_cast %c2_i32 : i32 to index
    %c0_41 = arith.constant 0 : index
    %c0_42 = arith.constant 0 : index
    %85 = vector.load %arg3[%84, %c0_41, %c0_42] : memref<8x16x128xbf16, #tpu.memory_space<vmem>>, vector<1x16x128xbf16>
    %86 = vector.shape_cast %85 : vector<1x16x128xbf16> to vector<16x128xbf16>
    %87 = vector.shape_cast %83 : vector<16x128xbf16> to vector<1x16x128xbf16>
    tpu.vector_store %arg3[%84, %c0_41, %c0_42], %87 {strides = array<i32>} : memref<8x16x128xbf16, #tpu.memory_space<vmem>>, vector<1x16x128xbf16>,
    %c3_i32 = arith.constant 3 : i32
    %88 = arith.index_cast %c3_i32 : i32 to index
    %c0_43 = arith.constant 0 : index
    %c0_44 = arith.constant 0 : index
    %89 = vector.load %arg2[%88, %c0_43, %c0_44] : memref<8x16x128xf32, #tpu.memory_space<vmem>>, vector<1x16x128xf32>
    %90 = vector.shape_cast %89 : vector<1x16x128xf32> to vector<16x128xf32>
    %cst_45 = arith.constant 0.882496893 : f32
    %91 = vector.broadcast %cst_45 : f32 to vector<16x128xf32>
    %92 = arith.mulf %91, %82 : vector<16x128xf32>
    %cst_46 = arith.constant 0.882496893 : f32
    %93 = vector.broadcast %cst_46 : f32 to vector<16x128xf32>
    %94 = arith.subf %93, %92 : vector<16x128xf32>
    %95 = arith.mulf %94, %73 : vector<16x128xf32>
    %cst_47 = arith.constant 0.940024793 : f32
    %96 = vector.broadcast %cst_47 : f32 to vector<16x128xf32>
    %97 = arith.mulf %96, %90 : vector<16x128xf32>
    %98 = arith.addf %95, %97 : vector<16x128xf32>
    %cst_48 = arith.constant 1.000000e+00 : f32
    %99 = vector.broadcast %cst_48 : f32 to vector<16x128xf32>
    %100 = arith.cmpf ogt, %98, %99 : vector<16x128xf32>
    %cst_49 = arith.constant 1.000000e+00 : f32
    %101 = vector.broadcast %cst_49 : f32 to vector<16x128xf32>
    %102 = arith.cmpf olt, %98, %101 : vector<16x128xf32>
    %cst_50 = arith.constant 0.000000e+00 : f32
    %cst_51 = arith.constant 5.000000e-01 : f32
    %103 = vector.broadcast %cst_50 : f32 to vector<16x128xf32>
    %104 = vector.broadcast %cst_51 : f32 to vector<16x128xf32>
    %105 = arith.select %102, %103, %104 : vector<16x128xi1>, vector<16x128xf32>
    %cst_52 = arith.constant 1.000000e+00 : f32
    %106 = vector.broadcast %cst_52 : f32 to vector<16x128xf32>
    %107 = arith.select %100, %106, %105 : vector<16x128xi1>, vector<16x128xf32>
    %108 = arith.truncf %107 : vector<16x128xf32> to vector<16x128xbf16>
    %109 = arith.index_cast %c3_i32 : i32 to index
    %c0_53 = arith.constant 0 : index
    %c0_54 = arith.constant 0 : index
    %110 = vector.load %arg3[%109, %c0_53, %c0_54] : memref<8x16x128xbf16, #tpu.memory_space<vmem>>, vector<1x16x128xbf16>
    %111 = vector.shape_cast %110 : vector<1x16x128xbf16> to vector<16x128xbf16>
    %112 = vector.shape_cast %108 : vector<16x128xbf16> to vector<1x16x128xbf16>
    tpu.vector_store %arg3[%109, %c0_53, %c0_54], %112 {strides = array<i32>} : memref<8x16x128xbf16, #tpu.memory_space<vmem>>, vector<1x16x128xbf16>,
    %c4_i32 = arith.constant 4 : i32
    %113 = arith.index_cast %c4_i32 : i32 to index
    %c0_55 = arith.constant 0 : index
    %c0_56 = arith.constant 0 : index
    %114 = vector.load %arg2[%113, %c0_55, %c0_56] : memref<8x16x128xf32, #tpu.memory_space<vmem>>, vector<1x16x128xf32>
    %115 = vector.shape_cast %114 : vector<1x16x128xf32> to vector<16x128xf32>
    %cst_57 = arith.constant 0.882496893 : f32
    %116 = vector.broadcast %cst_57 : f32 to vector<16x128xf32>
    %117 = arith.mulf %116, %107 : vector<16x128xf32>
    %cst_58 = arith.constant 0.882496893 : f32
    %118 = vector.broadcast %cst_58 : f32 to vector<16x128xf32>
    %119 = arith.subf %118, %117 : vector<16x128xf32>
    %120 = arith.mulf %119, %98 : vector<16x128xf32>
    %cst_59 = arith.constant 0.940024793 : f32
    %121 = vector.broadcast %cst_59 : f32 to vector<16x128xf32>
    %122 = arith.mulf %121, %115 : vector<16x128xf32>
    %123 = arith.addf %120, %122 : vector<16x128xf32>
    %cst_60 = arith.constant 1.000000e+00 : f32
    %124 = vector.broadcast %cst_60 : f32 to vector<16x128xf32>
    %125 = arith.cmpf ogt, %123, %124 : vector<16x128xf32>
    %cst_61 = arith.constant 1.000000e+00 : f32
    %126 = vector.broadcast %cst_61 : f32 to vector<16x128xf32>
    %127 = arith.cmpf olt, %123, %126 : vector<16x128xf32>
    %cst_62 = arith.constant 0.000000e+00 : f32
    %cst_63 = arith.constant 5.000000e-01 : f32
    %128 = vector.broadcast %cst_62 : f32 to vector<16x128xf32>
    %129 = vector.broadcast %cst_63 : f32 to vector<16x128xf32>
    %130 = arith.select %127, %128, %129 : vector<16x128xi1>, vector<16x128xf32>
    %cst_64 = arith.constant 1.000000e+00 : f32
    %131 = vector.broadcast %cst_64 : f32 to vector<16x128xf32>
    %132 = arith.select %125, %131, %130 : vector<16x128xi1>, vector<16x128xf32>
    %133 = arith.truncf %132 : vector<16x128xf32> to vector<16x128xbf16>
    %134 = arith.index_cast %c4_i32 : i32 to index
    %c0_65 = arith.constant 0 : index
    %c0_66 = arith.constant 0 : index
    %135 = vector.load %arg3[%134, %c0_65, %c0_66] : memref<8x16x128xbf16, #tpu.memory_space<vmem>>, vector<1x16x128xbf16>
    %136 = vector.shape_cast %135 : vector<1x16x128xbf16> to vector<16x128xbf16>
    %137 = vector.shape_cast %133 : vector<16x128xbf16> to vector<1x16x128xbf16>
    tpu.vector_store %arg3[%134, %c0_65, %c0_66], %137 {strides = array<i32>} : memref<8x16x128xbf16, #tpu.memory_space<vmem>>, vector<1x16x128xbf16>,
    %c5_i32 = arith.constant 5 : i32
    %138 = arith.index_cast %c5_i32 : i32 to index
    %c0_67 = arith.constant 0 : index
    %c0_68 = arith.constant 0 : index
    %139 = vector.load %arg2[%138, %c0_67, %c0_68] : memref<8x16x128xf32, #tpu.memory_space<vmem>>, vector<1x16x128xf32>
    %140 = vector.shape_cast %139 : vector<1x16x128xf32> to vector<16x128xf32>
    %cst_69 = arith.constant 0.882496893 : f32
    %141 = vector.broadcast %cst_69 : f32 to vector<16x128xf32>
    %142 = arith.mulf %141, %132 : vector<16x128xf32>
    %cst_70 = arith.constant 0.882496893 : f32
    %143 = vector.broadcast %cst_70 : f32 to vector<16x128xf32>
    %144 = arith.subf %143, %142 : vector<16x128xf32>
    %145 = arith.mulf %144, %123 : vector<16x128xf32>
    %cst_71 = arith.constant 0.940024793 : f32
    %146 = vector.broadcast %cst_71 : f32 to vector<16x128xf32>
    %147 = arith.mulf %146, %140 : vector<16x128xf32>
    %148 = arith.addf %145, %147 : vector<16x128xf32>
    %cst_72 = arith.constant 1.000000e+00 : f32
    %149 = vector.broadcast %cst_72 : f32 to vector<16x128xf32>
    %150 = arith.cmpf ogt, %148, %149 : vector<16x128xf32>
    %cst_73 = arith.constant 1.000000e+00 : f32
    %151 = vector.broadcast %cst_73 : f32 to vector<16x128xf32>
    %152 = arith.cmpf olt, %148, %151 : vector<16x128xf32>
    %cst_74 = arith.constant 0.000000e+00 : f32
    %cst_75 = arith.constant 5.000000e-01 : f32
    %153 = vector.broadcast %cst_74 : f32 to vector<16x128xf32>
    %154 = vector.broadcast %cst_75 : f32 to vector<16x128xf32>
    %155 = arith.select %152, %153, %154 : vector<16x128xi1>, vector<16x128xf32>
    %cst_76 = arith.constant 1.000000e+00 : f32
    %156 = vector.broadcast %cst_76 : f32 to vector<16x128xf32>
    %157 = arith.select %150, %156, %155 : vector<16x128xi1>, vector<16x128xf32>
    %158 = arith.truncf %157 : vector<16x128xf32> to vector<16x128xbf16>
    %159 = arith.index_cast %c5_i32 : i32 to index
    %c0_77 = arith.constant 0 : index
    %c0_78 = arith.constant 0 : index
    %160 = vector.load %arg3[%159, %c0_77, %c0_78] : memref<8x16x128xbf16, #tpu.memory_space<vmem>>, vector<1x16x128xbf16>
    %161 = vector.shape_cast %160 : vector<1x16x128xbf16> to vector<16x128xbf16>
    %162 = vector.shape_cast %158 : vector<16x128xbf16> to vector<1x16x128xbf16>
    tpu.vector_store %arg3[%159, %c0_77, %c0_78], %162 {strides = array<i32>} : memref<8x16x128xbf16, #tpu.memory_space<vmem>>, vector<1x16x128xbf16>,
    %c6_i32 = arith.constant 6 : i32
    %163 = arith.index_cast %c6_i32 : i32 to index
    %c0_79 = arith.constant 0 : index
    %c0_80 = arith.constant 0 : index
    %164 = vector.load %arg2[%163, %c0_79, %c0_80] : memref<8x16x128xf32, #tpu.memory_space<vmem>>, vector<1x16x128xf32>
    %165 = vector.shape_cast %164 : vector<1x16x128xf32> to vector<16x128xf32>
    %cst_81 = arith.constant 0.882496893 : f32
    %166 = vector.broadcast %cst_81 : f32 to vector<16x128xf32>
    %167 = arith.mulf %166, %157 : vector<16x128xf32>
    %cst_82 = arith.constant 0.882496893 : f32
    %168 = vector.broadcast %cst_82 : f32 to vector<16x128xf32>
    %169 = arith.subf %168, %167 : vector<16x128xf32>
    %170 = arith.mulf %169, %148 : vector<16x128xf32>
    %cst_83 = arith.constant 0.940024793 : f32
    %171 = vector.broadcast %cst_83 : f32 to vector<16x128xf32>
    %172 = arith.mulf %171, %165 : vector<16x128xf32>
    %173 = arith.addf %170, %172 : vector<16x128xf32>
    %cst_84 = arith.constant 1.000000e+00 : f32
    %174 = vector.broadcast %cst_84 : f32 to vector<16x128xf32>
    %175 = arith.cmpf ogt, %173, %174 : vector<16x128xf32>
    %cst_85 = arith.constant 1.000000e+00 : f32
    %176 = vector.broadcast %cst_85 : f32 to vector<16x128xf32>
    %177 = arith.cmpf olt, %173, %176 : vector<16x128xf32>
    %cst_86 = arith.constant 0.000000e+00 : f32
    %cst_87 = arith.constant 5.000000e-01 : f32
    %178 = vector.broadcast %cst_86 : f32 to vector<16x128xf32>
    %179 = vector.broadcast %cst_87 : f32 to vector<16x128xf32>
    %180 = arith.select %177, %178, %179 : vector<16x128xi1>, vector<16x128xf32>
    %cst_88 = arith.constant 1.000000e+00 : f32
    %181 = vector.broadcast %cst_88 : f32 to vector<16x128xf32>
    %182 = arith.select %175, %181, %180 : vector<16x128xi1>, vector<16x128xf32>
    %183 = arith.truncf %182 : vector<16x128xf32> to vector<16x128xbf16>
    %184 = arith.index_cast %c6_i32 : i32 to index
    %c0_89 = arith.constant 0 : index
    %c0_90 = arith.constant 0 : index
    %185 = vector.load %arg3[%184, %c0_89, %c0_90] : memref<8x16x128xbf16, #tpu.memory_space<vmem>>, vector<1x16x128xbf16>
    %186 = vector.shape_cast %185 : vector<1x16x128xbf16> to vector<16x128xbf16>
    %187 = vector.shape_cast %183 : vector<16x128xbf16> to vector<1x16x128xbf16>
    tpu.vector_store %arg3[%184, %c0_89, %c0_90], %187 {strides = array<i32>} : memref<8x16x128xbf16, #tpu.memory_space<vmem>>, vector<1x16x128xbf16>,
    %c7_i32 = arith.constant 7 : i32
    %188 = arith.index_cast %c7_i32 : i32 to index
    %c0_91 = arith.constant 0 : index
    %c0_92 = arith.constant 0 : index
    %189 = vector.load %arg2[%188, %c0_91, %c0_92] : memref<8x16x128xf32, #tpu.memory_space<vmem>>, vector<1x16x128xf32>
    %190 = vector.shape_cast %189 : vector<1x16x128xf32> to vector<16x128xf32>
    %cst_93 = arith.constant 0.882496893 : f32
    %191 = vector.broadcast %cst_93 : f32 to vector<16x128xf32>
    %192 = arith.mulf %191, %182 : vector<16x128xf32>
    %cst_94 = arith.constant 0.882496893 : f32
    %193 = vector.broadcast %cst_94 : f32 to vector<16x128xf32>
    %194 = arith.subf %193, %192 : vector<16x128xf32>
    %195 = arith.mulf %194, %173 : vector<16x128xf32>
    %cst_95 = arith.constant 0.940024793 : f32
    %196 = vector.broadcast %cst_95 : f32 to vector<16x128xf32>
    %197 = arith.mulf %196, %190 : vector<16x128xf32>
    %198 = arith.addf %195, %197 : vector<16x128xf32>
    %cst_96 = arith.constant 1.000000e+00 : f32
    %199 = vector.broadcast %cst_96 : f32 to vector<16x128xf32>
    %200 = arith.cmpf ogt, %198, %199 : vector<16x128xf32>
    %cst_97 = arith.constant 1.000000e+00 : f32
    %201 = vector.broadcast %cst_97 : f32 to vector<16x128xf32>
    %202 = arith.cmpf olt, %198, %201 : vector<16x128xf32>
    %cst_98 = arith.constant 0.000000e+00 : f32
    %cst_99 = arith.constant 5.000000e-01 : f32
    %203 = vector.broadcast %cst_98 : f32 to vector<16x128xf32>
    %204 = vector.broadcast %cst_99 : f32 to vector<16x128xf32>
    %205 = arith.select %202, %203, %204 : vector<16x128xi1>, vector<16x128xf32>
    %cst_100 = arith.constant 1.000000e+00 : f32
    %206 = vector.broadcast %cst_100 : f32 to vector<16x128xf32>
    %207 = arith.select %200, %206, %205 : vector<16x128xi1>, vector<16x128xf32>
    %208 = arith.truncf %207 : vector<16x128xf32> to vector<16x128xbf16>
    %209 = arith.index_cast %c7_i32 : i32 to index
    %c0_101 = arith.constant 0 : index
    %c0_102 = arith.constant 0 : index
    %210 = vector.load %arg3[%209, %c0_101, %c0_102] : memref<8x16x128xbf16, #tpu.memory_space<vmem>>, vector<1x16x128xbf16>
    %211 = vector.shape_cast %210 : vector<1x16x128xbf16> to vector<16x128xbf16>
    %212 = vector.shape_cast %208 : vector<16x128xbf16> to vector<1x16x128xbf16>
    tpu.vector_store %arg3[%209, %c0_101, %c0_102], %212 {strides = array<i32>} : memref<8x16x128xbf16, #tpu.memory_space<vmem>>, vector<1x16x128xbf16>,
    %c8_i32 = arith.constant 8 : i32
    %c0_103 = arith.constant 0 : index
    %c0_104 = arith.constant 0 : index
    %213 = vector.load %arg4[%c0_103, %c0_104] : memref<16x128xf32, #tpu.memory_space<vmem>>, vector<16x128xf32>
    tpu.vector_store %arg4[%c0_103, %c0_104], %198 {strides = array<i32>} : memref<16x128xf32, #tpu.memory_space<vmem>>, vector<16x128xf32>,
    return
  }
  func.func @transform_0(%arg0: i32, %arg1: i32) -> (i32, i32, i32) {
    %c0_i32 = arith.constant 0 : i32
    %c0_i32_0 = arith.constant 0 : i32
    return %arg1, %arg0, %c0_i32 : i32, i32, i32
  }
  func.func @transform_1(%arg0: i32, %arg1: i32) -> (i32, i32, i32) {
    %c0_i32 = arith.constant 0 : i32
    %c0_i32_0 = arith.constant 0 : i32
    return %arg1, %arg0, %c0_i32 : i32, i32, i32
  }
  func.func @transform_2(%arg0: i32, %arg1: i32) -> (i32, i32) {
    %c0_i32 = arith.constant 0 : i32
    %c0_i32_0 = arith.constant 0 : i32
    return %arg0, %c0_i32 : i32, i32
  }
}

</mosaic_0001>

<llo_original>
// kernel: tpu_custom_call.1
$region0: #{tpu_custom_call.1}
  #allocation0 [shape = 'u32[]', space=smem, size = 0x4, offset = 0x4, fixed_abs, tag = 'smem constant byte address 0x4 - core index']
  #allocation1 [shape = 'u32[72,128]{1,0:T(1,128)}', space=vmem, size = 0x9000, scoped, tag = 'internal scratch']
  %s0 = inlined_call_operand.hbm [shape: f32[8,16,128], index: 0, kind: input, shape index: {}]
  %s1 = inlined_call_operand.hbm [shape: bf16[8,16,128], index: 1, kind: output, shape index: {0}]
  %s2 = inlined_call_operand.hbm [shape: f32[16,128], index: 2, kind: output, shape index: {1}]
  %3 = xla_tuple %s1, %s2
  %s4 = sld [smem:[#allocation0]]
  $region26: #{tpu_custom_call.1} parent=0
    _
  %s6 = ssub.s32 1, %s4
  %s7 = scalar_select 0, %s6, %s4
  $region1: #{tpu_custom_call.1} parent=0
    #allocation2 [shape = 'u8[65536]{0}', space=vmem, size = 0x10000, scoped, tag = 'input window, operand 0, single buffered']
    #allocation3 [shape = 's32[1]{0}', space=sflag, size = 0x4, scoped, tag = 'scoped memory for tpu_custom_call.1']
    #allocation4 [shape = 's32[1]{0}', space=sflag, size = 0x4, scoped, tag = 'scoped memory for tpu_custom_call.1']
    #allocation5 [shape = 'u8[32768]{0}', space=vmem, size = 0x8000, scoped, tag = 'output window, operand 0, single buffered']
    #allocation6 [shape = 'u8[8192]{0}', space=vmem, size = 0x2000, scoped, tag = 'output window, operand 1, single buffered']
    #allocation7 [shape = 's32[1]{0}', space=sflag, size = 0x4, scoped, tag = 'scoped memory for tpu_custom_call.1']
    %8 = vsyncpa [#allocation3], 0
    %9 = vsyncpa [#allocation4], 0
    %10 = vsyncpa [#allocation7], 0
    // Predicated region
    $region2: #{tpu_custom_call.1} parent=1 // pred_check
      _
    $region3: #{tpu_custom_call.1} parent=1 // pred_check_branch
      %12 = sbr.rel (0) target = $region5
    $region4: #{tpu_custom_call.1} parent=1 // pred_region
      %14 = vsyncadd [#allocation3], 0
      %s15 = sshll.u32 %s0, 4
      %s16 = int_to_ptr.hbm [resolvable:$true] %s15
      %s17 = sshll.u32 [#allocation2], 4
      %s18 = int_to_ptr.vmem [resolvable:$true] %s17
      %23 = dma.hbm_to_vmem [thread:$0]  %s16, 2048, %s18, [#allocation3], 128, 128, 8
    $region5: #{tpu_custom_call.1} parent=1 // pred_fallthru
      _
    // Predicated region
    $region6: #{tpu_custom_call.1} parent=1 // pred_check
      _
    $region7: #{tpu_custom_call.1} parent=1 // pred_check_branch
      %25 = sbr.rel (0) target = $region9
    $region8: #{tpu_custom_call.1} parent=1 // pred_region
      %27 = dma.done [#allocation3], 2048
    $region9: #{tpu_custom_call.1} parent=1 // pred_fallthru
      _
    %p28 = scmp.eq.s32.totalorder 0, 0
    %v29 = vld [vmem:[#allocation6] sm:$0xff]
    %v30 = vld [vmem:[#allocation6 + $0x8] sm:$0xff]
    %s31 = scalar_select %p28, 1, 0
    %v32 = vstv %s31
    %vm33 = vcmp.eq.s32.totalorder %v32, 1
    %v34 = vsel %vm33, 0.0, %v29
    %v35 = vsel %vm33, 0.0, %v30
    %vm36 = vcmp.gt.f32.partialorder %v34, 1.0
    %vm37 = vcmp.gt.f32.partialorder %v35, 1.0
    %vm38 = vcmp.lt.f32.partialorder %v34, 1.0
    %vm39 = vcmp.lt.f32.partialorder %v35, 1.0
    %v40 = vsel %vm38, 0.0, 0.5
    %v41 = vsel %vm39, 0.0, 0.5
    %v42 = vsel %vm36, 1.0, %v40
    %v43 = vsel %vm37, 1.0, %v41
    %v44 = vld [vmem:[#allocation2] sm:$0xff]
    %v45 = vld [vmem:[#allocation2 + $0x8] sm:$0xff]
    %v46 = vmul.f32 %v42, 0.8824969
    %v47 = vmul.f32 %v43, 0.8824969
    %v48 = vsub.f32 0.8824969, %v46
    %v49 = vsub.f32 0.8824969, %v47
    %v50 = vmul.f32 %v48, %v34
    %v51 = vmul.f32 %v49, %v35
    %v52 = vmul.f32 %v44, 0.9400248
    %v53 = vmul.f32 %v45, 0.9400248
    %v54 = vadd.f32 %v50, %v52
    %v55 = vadd.f32 %v51, %v53
    %vm56 = vcmp.gt.f32.partialorder %v54, 1.0
    %vm57 = vcmp.gt.f32.partialorder %v55, 1.0
    %vm58 = vcmp.lt.f32.partialorder %v54, 1.0
    %vm59 = vcmp.lt.f32.partialorder %v55, 1.0
    %v60 = vsel %vm58, 0.0, 0.5
    %v61 = vsel %vm59, 0.0, 0.5
    %v62 = vsel %vm56, 1.0, %v60
    %v63 = vsel %vm57, 1.0, %v61
    %v64 = vpack.c.bf16 %v62, %v62
    %v65 = vpack.c.bf16 %v63, %v63
    %66 = vst [vmem:[#allocation5] sm:$0xf] %v64
    %67 = vst [vmem:[#allocation5 + $0x4] sm:$0xf] %v65
    %s68 = scalar_lea.vmem [#allocation2], 16
    %v69 = vld [vmem:[%s68] sm:$0xff]
    %v70 = vld [vmem:[%s68 + $0x8] sm:$0xff]
    %v71 = vmul.f32 %v62, 0.8824969
    %v72 = vmul.f32 %v63, 0.8824969
    %v73 = vsub.f32 0.8824969, %v71
    %v74 = vsub.f32 0.8824969, %v72
    %v75 = vmul.f32 %v73, %v54
    %v76 = vmul.f32 %v74, %v55
    %v77 = vmul.f32 %v69, 0.9400248
    %v78 = vmul.f32 %v70, 0.9400248
    %v79 = vadd.f32 %v75, %v77
    %v80 = vadd.f32 %v76, %v78
    %vm81 = vcmp.gt.f32.partialorder %v79, 1.0
    %vm82 = vcmp.gt.f32.partialorder %v80, 1.0
    %vm83 = vcmp.lt.f32.partialorder %v79, 1.0
    %vm84 = vcmp.lt.f32.partialorder %v80, 1.0
    %v85 = vsel %vm83, 0.0, 0.5
    %v86 = vsel %vm84, 0.0, 0.5
    %v87 = vsel %vm81, 1.0, %v85
    %v88 = vsel %vm82, 1.0, %v86
    %v89 = vpack.c.bf16 %v87, %v87
    %v90 = vpack.c.bf16 %v88, %v88
    %s91 = scalar_lea.vmem [#allocation5], 8
    %92 = vst [vmem:[%s91] sm:$0xf] %v89
    %93 = vst [vmem:[%s91 + $0x4] sm:$0xf] %v90
    %s94 = scalar_lea.vmem [#allocation2], 32
    %v95 = vld [vmem:[%s94] sm:$0xff]
    %v96 = vld [vmem:[%s94 + $0x8] sm:$0xff]
    %v97 = vmul.f32 %v87, 0.8824969
    %v98 = vmul.f32 %v88, 0.8824969
    %v99 = vsub.f32 0.8824969, %v97
    %v100 = vsub.f32 0.8824969, %v98
    %v101 = vmul.f32 %v99, %v79
    %v102 = vmul.f32 %v100, %v80
    %v103 = vmul.f32 %v95, 0.9400248
    %v104 = vmul.f32 %v96, 0.9400248
    %v105 = vadd.f32 %v101, %v103
    %v106 = vadd.f32 %v102, %v104
    %vm107 = vcmp.gt.f32.partialorder %v105, 1.0
    %vm108 = vcmp.gt.f32.partialorder %v106, 1.0
    %vm109 = vcmp.lt.f32.partialorder %v105, 1.0
    %vm110 = vcmp.lt.f32.partialorder %v106, 1.0
    %v111 = vsel %vm109, 0.0, 0.5
    %v112 = vsel %vm110, 0.0, 0.5
    %v113 = vsel %vm107, 1.0, %v111
    %v114 = vsel %vm108, 1.0, %v112
    %v115 = vpack.c.bf16 %v113, %v113
    %v116 = vpack.c.bf16 %v114, %v114
    %s117 = scalar_lea.vmem [#allocation5], 16
    %118 = vst [vmem:[%s117] sm:$0xf] %v115
    %119 = vst [vmem:[%s117 + $0x4] sm:$0xf] %v116
    %s120 = scalar_lea.vmem [#allocation2], 48
    %v121 = vld [vmem:[%s120] sm:$0xff]
    %v122 = vld [vmem:[%s120 + $0x8] sm:$0xff]
    %v123 = vmul.f32 %v113, 0.8824969
    %v124 = vmul.f32 %v114, 0.8824969
    %v125 = vsub.f32 0.8824969, %v123
    %v126 = vsub.f32 0.8824969, %v124
    %v127 = vmul.f32 %v125, %v105
    %v128 = vmul.f32 %v126, %v106
    %v129 = vmul.f32 %v121, 0.9400248
    %v130 = vmul.f32 %v122, 0.9400248
    %v131 = vadd.f32 %v127, %v129
    %v132 = vadd.f32 %v128, %v130
    %vm133 = vcmp.gt.f32.partialorder %v131, 1.0
    %vm134 = vcmp.gt.f32.partialorder %v132, 1.0
    %vm135 = vcmp.lt.f32.partialorder %v131, 1.0
    %vm136 = vcmp.lt.f32.partialorder %v132, 1.0
    %v137 = vsel %vm135, 0.0, 0.5
    %v138 = vsel %vm136, 0.0, 0.5
    %v139 = vsel %vm133, 1.0, %v137
    %v140 = vsel %vm134, 1.0, %v138
    %v141 = vpack.c.bf16 %v139, %v139
    %v142 = vpack.c.bf16 %v140, %v140
    %s143 = scalar_lea.vmem [#allocation5], 24
    %144 = vst [vmem:[%s143] sm:$0xf] %v141
    %145 = vst [vmem:[%s143 + $0x4] sm:$0xf] %v142
    %s146 = scalar_lea.vmem [#allocation2], 64
    %v147 = vld [vmem:[%s146] sm:$0xff]
    %v148 = vld [vmem:[%s146 + $0x8] sm:$0xff]
    %v149 = vmul.f32 %v139, 0.8824969
    %v150 = vmul.f32 %v140, 0.8824969
    %v151 = vsub.f32 0.8824969, %v149
    %v152 = vsub.f32 0.8824969, %v150
    %v153 = vmul.f32 %v151, %v131
    %v154 = vmul.f32 %v152, %v132
    %v155 = vmul.f32 %v147, 0.9400248
    %v156 = vmul.f32 %v148, 0.9400248
    %v157 = vadd.f32 %v153, %v155
    %v158 = vadd.f32 %v154, %v156
    %vm159 = vcmp.gt.f32.partialorder %v157, 1.0
    %vm160 = vcmp.gt.f32.partialorder %v158, 1.0
    %vm161 = vcmp.lt.f32.partialorder %v157, 1.0
    %vm162 = vcmp.lt.f32.partialorder %v158, 1.0
    %v163 = vsel %vm161, 0.0, 0.5
    %v164 = vsel %vm162, 0.0, 0.5
    %v165 = vsel %vm159, 1.0, %v163
    %v166 = vsel %vm160, 1.0, %v164
    %v167 = vpack.c.bf16 %v165, %v165
    %v168 = vpack.c.bf16 %v166, %v166
    %s169 = scalar_lea.vmem [#allocation5], 32
    %170 = vst [vmem:[%s169] sm:$0xf] %v167
    %171 = vst [vmem:[%s169 + $0x4] sm:$0xf] %v168
    %s172 = scalar_lea.vmem [#allocation2], 80
    %v173 = vld [vmem:[%s172] sm:$0xff]
    %v174 = vld [vmem:[%s172 + $0x8] sm:$0xff]
    %v175 = vmul.f32 %v165, 0.8824969
    %v176 = vmul.f32 %v166, 0.8824969
    %v177 = vsub.f32 0.8824969, %v175
    %v178 = vsub.f32 0.8824969, %v176
    %v179 = vmul.f32 %v177, %v157
    %v180 = vmul.f32 %v178, %v158
    %v181 = vmul.f32 %v173, 0.9400248
    %v182 = vmul.f32 %v174, 0.9400248
    %v183 = vadd.f32 %v179, %v181
    %v184 = vadd.f32 %v180, %v182
    %vm185 = vcmp.gt.f32.partialorder %v183, 1.0
    %vm186 = vcmp.gt.f32.partialorder %v184, 1.0
    %vm187 = vcmp.lt.f32.partialorder %v183, 1.0
    %vm188 = vcmp.lt.f32.partialorder %v184, 1.0
    %v189 = vsel %vm187, 0.0, 0.5
    %v190 = vsel %vm188, 0.0, 0.5
    %v191 = vsel %vm185, 1.0, %v189
    %v192 = vsel %vm186, 1.0, %v190
    %v193 = vpack.c.bf16 %v191, %v191
    %v194 = vpack.c.bf16 %v192, %v192
    %s195 = scalar_lea.vmem [#allocation5], 40
    %196 = vst [vmem:[%s195] sm:$0xf] %v193
    %197 = vst [vmem:[%s195 + $0x4] sm:$0xf] %v194
    %s198 = scalar_lea.vmem [#allocation2], 96
    %v199 = vld [vmem:[%s198] sm:$0xff]
    %v200 = vld [vmem:[%s198 + $0x8] sm:$0xff]
    %v201 = vmul.f32 %v191, 0.8824969
    %v202 = vmul.f32 %v192, 0.8824969
    %v203 = vsub.f32 0.8824969, %v201
    %v204 = vsub.f32 0.8824969, %v202
    %v205 = vmul.f32 %v203, %v183
    %v206 = vmul.f32 %v204, %v184
    %v207 = vmul.f32 %v199, 0.9400248
    %v208 = vmul.f32 %v200, 0.9400248
    %v209 = vadd.f32 %v205, %v207
    %v210 = vadd.f32 %v206, %v208
    %vm211 = vcmp.gt.f32.partialorder %v209, 1.0
    %vm212 = vcmp.gt.f32.partialorder %v210, 1.0
    %vm213 = vcmp.lt.f32.partialorder %v209, 1.0
    %vm214 = vcmp.lt.f32.partialorder %v210, 1.0
    %v215 = vsel %vm213, 0.0, 0.5
    %v216 = vsel %vm214, 0.0, 0.5
    %v217 = vsel %vm211, 1.0, %v215
    %v218 = vsel %vm212, 1.0, %v216
    %v219 = vpack.c.bf16 %v217, %v217
    %v220 = vpack.c.bf16 %v218, %v218
    %s221 = scalar_lea.vmem [#allocation5], 48
    %222 = vst [vmem:[%s221] sm:$0xf] %v219
    %223 = vst [vmem:[%s221 + $0x4] sm:$0xf] %v220
    %s224 = scalar_lea.vmem [#allocation2], 112
    %v225 = vld [vmem:[%s224] sm:$0xff]
    %v226 = vld [vmem:[%s224 + $0x8] sm:$0xff]
    %v227 = vmul.f32 %v217, 0.8824969
    %v228 = vmul.f32 %v218, 0.8824969
    %v229 = vsub.f32 0.8824969, %v227
    %v230 = vsub.f32 0.8824969, %v228
    %v231 = vmul.f32 %v229, %v209
    %v232 = vmul.f32 %v230, %v210
    %v233 = vmul.f32 %v225, 0.9400248
    %v234 = vmul.f32 %v226, 0.9400248
    %v235 = vadd.f32 %v231, %v233
    %v236 = vadd.f32 %v232, %v234
    %vm237 = vcmp.gt.f32.partialorder %v235, 1.0
    %vm238 = vcmp.gt.f32.partialorder %v236, 1.0
    %vm239 = vcmp.lt.f32.partialorder %v235, 1.0
    %vm240 = vcmp.lt.f32.partialorder %v236, 1.0
    %v241 = vsel %vm239, 0.0, 0.5
    %v242 = vsel %vm240, 0.0, 0.5
    %v243 = vsel %vm237, 1.0, %v241
    %v244 = vsel %vm238, 1.0, %v242
    %v245 = vpack.c.bf16 %v243, %v243
    %v246 = vpack.c.bf16 %v244, %v244
    %s247 = scalar_lea.vmem [#allocation5], 56
    %248 = vst [vmem:[%s247] sm:$0xf] %v245
    %249 = vst [vmem:[%s247 + $0x4] sm:$0xf] %v246
    %250 = vst [vmem:[#allocation6] sm:$0xff] %v235
    %251 = vst [vmem:[#allocation6 + $0x8] sm:$0xff] %v236
    // Predicated region
    $region10: #{tpu_custom_call.1} parent=1 // pred_check
      _
    $region11: #{tpu_custom_call.1} parent=1 // pred_check_branch
      %253 = sbr.rel (0) target = $region13
    $region12: #{tpu_custom_call.1} parent=1 // pred_region
      %255 = vsyncadd [#allocation4], 0
      %s256 = sshll.u32 [#allocation5], 4
      %s257 = int_to_ptr.vmem [resolvable:$true] %s256
      %s258 = sshll.u32 %s1, 4
      %s259 = int_to_ptr.hbm [resolvable:$true] %s258
      %264 = dma.vmem_to_hbm [thread:$0]  %s257, 1024, %s259, [#allocation4], 64, 64, 4
    $region13: #{tpu_custom_call.1} parent=1 // pred_fallthru
      _
    // Predicated region
    $region14: #{tpu_custom_call.1} parent=1 // pred_check
      _
    $region15: #{tpu_custom_call.1} parent=1 // pred_check_branch
      %266 = sbr.rel (0) target = $region17
    $region16: #{tpu_custom_call.1} parent=1 // pred_region
      %268 = vsyncadd [#allocation7], 0
      %s269 = sshll.u32 [#allocation6], 4
      %s270 = int_to_ptr.vmem [resolvable:$true] %s269
      %s271 = sshll.u32 %s2, 4
      %s272 = int_to_ptr.hbm [resolvable:$true] %s271
      %277 = dma.vmem_to_hbm [thread:$0]  %s270, 256, %s272, [#allocation7], 128, 128, 8
    $region17: #{tpu_custom_call.1} parent=1 // pred_fallthru
      _
    // Predicated region
    $region18: #{tpu_custom_call.1} parent=1 // pred_check
      _
    $region19: #{tpu_custom_call.1} parent=1 // pred_check_branch
      %279 = sbr.rel (0) target = $region21
    $region20: #{tpu_custom_call.1} parent=1 // pred_region
      %281 = dma.done [#allocation4], 1024
    $region21: #{tpu_custom_call.1} parent=1 // pred_fallthru
      _
    // Predicated region
    $region22: #{tpu_custom_call.1} parent=1 // pred_check
      _
    $region23: #{tpu_custom_call.1} parent=1 // pred_check_branch
      %283 = sbr.rel (0) target = $region25
    $region24: #{tpu_custom_call.1} parent=1 // pred_region
      %285 = dma.done [#allocation7], 256
    $region25: #{tpu_custom_call.1} parent=1 // pred_fallthru
      _
    %286 = vsyncpa [#allocation3], 1
    %287 = vsyncpa [#allocation4], 1
    %288 = vsyncpa [#allocation7], 1

</llo_original>
